<compile_context>
chip_gen: v6e
topology: v6e:2x2x1
jax: 0.10.0
libtpu: 0.0.40
codegen_flags: <defaults>
</compile_context>

<pallas_src>
import jax
import jax.numpy as jnp
from jax.experimental import pallas as pl
from jax.experimental.pallas import tpu as pltpu


# --------------------------------------------------------------------------
# Fused AFF Pallas kernel
# --------------------------------------------------------------------------
def _aff_kernel(x_ref, y_ref, w1x_ref, w1y_ref, b1_ref, w2_ref, b2_ref, o_ref):
    w1x = w1x_ref[...]                 # (inter, C)   BN1 scale pre-folded
    w1y = w1y_ref[...]                 # (inter, C)
    b1 = b1_ref[...]                   # (inter, 1)
    w2 = w2_ref[...]                   # (C, inter)   BN2 scale pre-folded
    b2 = b2_ref[...]                   # (C, 1)

    nb = x_ref.shape[0]                # trace-time constant -> unrolled loop
    for b in range(nb):
        x = x_ref[b]                   # (C, T) lane-dense tile
        y = y_ref[b]

        # 1x1 conv over cat([x, y], channel) == W1x @ x + W1y @ y   (+ BN shift)
        z1 = (jnp.dot(w1x, x, preferred_element_type=jnp.float32)
              + jnp.dot(w1y, y, preferred_element_type=jnp.float32)
              + b1)                    # (inter, T)

        # SiLU: z * sigmoid(z); reciprocal goes to the (otherwise idle) EUP.
        h = z1 * pl.reciprocal(1.0 + jnp.exp(-z1), approx=True)

        # Second 1x1 conv + folded BatchNorm.
        z2 = jnp.dot(w2, h, preferred_element_type=jnp.float32) + b2   # (C, T)

        att = 1.0 + jnp.tanh(z2)       # in [0, 2]
        # x*att + y*(2-att) == 2*y + att*(x - y)   (one fewer multiply)
        o_ref[b] = y * 2.0 + att * (x - y)


def _choose_tiles(N, C, HW):
    """Pick (batch block Nb, spatial block T) for HBM-streaming efficiency."""
    LANE = 128
    # Spatial tile: a multiple of 128 lanes (or the full dim when HW < 128),
    # up to 4096 lanes; never larger than HW rounded down to 128, so ragged
    # tails appear only as masked boundary blocks.
    if HW < LANE:
        T = HW
    else:
        T = min(4096, (HW // LANE) * LANE)
    # Batch block: when the spatial tile alone is small (early layers), block
    # the batch too so each grid step moves ~>=1 MiB per array.
    per_arr = C * T * 4
    Nb = max(1, min(N, (1 << 20) // max(1, per_arr), 16))

    # Give the megacore (v7x: 2 TCs) at least 2 parallel steps, but only when
    # splitting does not re-create overhead-dominated tiny steps.
    def steps(nb, t):
        return pl.cdiv(N, nb) * pl.cdiv(HW, t)

    while steps(Nb, T) < 2:
        if T >= 2 * LANE and (T // 2) % LANE == 0 and Nb * C * (T // 2) * 4 >= (512 << 10):
            T //= 2
        elif Nb > 1 and (Nb // 2) * C * T * 4 >= (512 << 10):
            Nb //= 2
        else:
            break
    return Nb, T


def aff_pallas(fp, x, y):
    """AFF forward. x, y: (N, C, H, W) float32 (NCHW, like PyTorch)."""
    N, C, H, W = x.shape
    inter = fp['w1x'].shape[0]
    HW = H * W
    Nb, T = _choose_tiles(N, C, HW)
    grid = (pl.cdiv(N, Nb), pl.cdiv(HW, T))

    x2 = x.reshape(N, C, HW)           # free view
    y2 = y.reshape(N, C, HW)

    flops = 6 * N * HW * C * inter                       # 2x (K=C) + 1x (K=inter) dots
    transc = N * HW * (2 * inter + C)                    # exp + rcp (inter) + tanh (C)
    bytes_acc = 4 * (3 * N * C * HW + 3 * inter * C + inter + C)

    out = pl.pallas_call(
        _aff_kernel,
        out_shape=jax.ShapeDtypeStruct((N, C, HW), jnp.float32),
        grid=grid,
        in_specs=[
            pl.BlockSpec((Nb, C, T), lambda n, t: (n, 0, t)),     # x
            pl.BlockSpec((Nb, C, T), lambda n, t: (n, 0, t)),     # y
            pl.BlockSpec((inter, C), lambda n, t: (0, 0)),        # w1x (BN1 folded)
            pl.BlockSpec((inter, C), lambda n, t: (0, 0)),        # w1y (BN1 folded)
            pl.BlockSpec((inter, 1), lambda n, t: (0, 0)),        # b1
            pl.BlockSpec((C, inter), lambda n, t: (0, 0)),        # w2  (BN2 folded)
            pl.BlockSpec((C, 1), lambda n, t: (0, 0)),            # b2
        ],
        out_specs=pl.BlockSpec((Nb, C, T), lambda n, t: (n, 0, t)),
        compiler_params=pltpu.CompilerParams(
            dimension_semantics=("parallel", "parallel"),
            vmem_limit_bytes=32 * 1024 * 1024),
        cost_estimate=pl.CostEstimate(flops=flops, transcendentals=transc,
                                      bytes_accessed=bytes_acc),
    )(x2, y2, fp['w1x'], fp['w1y'], fp['b1'], fp['w2'], fp['b2'])

    return out.reshape(N, C, H, W)


# --------------------------------------------------------------------------
# Deterministic parameters (conv + BN as in the PyTorch module) and folding
# --------------------------------------------------------------------------
def make_aff_params(key, channels, r=4):
    inter = channels // r
    ks = jax.random.split(key, 12)
    f32 = jnp.float32
    return dict(
        w1=(0.1 * jax.random.normal(ks[0], (inter, 2 * channels, 1, 1))).astype(f32),
        b1=(0.05 * jax.random.normal(ks[1], (inter,))).astype(f32),
        bn1_gamma=(1.0 + 0.1 * jax.random.normal(ks[2], (inter,))).astype(f32),
        bn1_beta=(0.1 * jax.random.normal(ks[3], (inter,))).astype(f32),
        bn1_mean=(0.05 * jax.random.normal(ks[4], (inter,))).astype(f32),
        bn1_var=jax.random.uniform(ks[5], (inter,), f32, 0.5, 1.5),
        w2=(0.1 * jax.random.normal(ks[6], (channels, inter, 1, 1))).astype(f32),
        b2=(0.05 * jax.random.normal(ks[7], (channels,))).astype(f32),
        bn2_gamma=(1.0 + 0.1 * jax.random.normal(ks[8], (channels,))).astype(f32),
        bn2_beta=(0.1 * jax.random.normal(ks[9], (channels,))).astype(f32),
        bn2_mean=(0.05 * jax.random.normal(ks[10], (channels,))).astype(f32),
        bn2_var=jax.random.uniform(ks[11], (channels,), f32, 0.5, 1.5),
    )


def fold_aff_params(p, eps=1e-5):
    """Fold eval-mode BN (and conv bias) into per-channel scale/shift; scale
    folded into the conv weights so the kernel only needs a shift vector."""
    C2 = p['w1'].shape[1]
    C = C2 // 2
    s1 = p['bn1_gamma'] / jnp.sqrt(p['bn1_var'] + eps)
    w1 = p['w1'][:, :, 0, 0] * s1[:, None]                       # (inter, 2C)
    shift1 = p['bn1_beta'] + (p['b1'] - p['bn1_mean']) * s1
    s2 = p['bn2_gamma'] / jnp.sqrt(p['bn2_var'] + eps)
    w2 = p['w2'][:, :, 0, 0] * s2[:, None]                       # (C, inter)
    shift2 = p['bn2_beta'] + (p['b2'] - p['bn2_mean']) * s2
    return dict(w1x=w1[:, :C], w1y=w1[:, C:], b1=shift1[:, None],
                w2=w2, b2=shift2[:, None])


# --------------------------------------------------------------------------
# Pure-JAX reference (unfused, unfolded) for validation
# --------------------------------------------------------------------------
def aff_reference(p, x, y, eps=1e-5):
    def bn(z, g, b, m, v):
        sh = (1, -1, 1, 1)
        return ((z - m.reshape(sh)) / jnp.sqrt(v.reshape(sh) + eps)
                * g.reshape(sh) + b.reshape(sh))

    xa = jnp.concatenate([x, y], axis=1)
    z = jnp.einsum('oi,nihw->nohw', p['w1'][:, :, 0, 0], xa) \
        + p['b1'][None, :, None, None]
    z = bn(z, p['bn1_gamma'], p['bn1_beta'], p['bn1_mean'], p['bn1_var'])
    z = z * jax.nn.sigmoid(z)                                    # SiLU
    z = jnp.einsum('oi,nihw->nohw', p['w2'][:, :, 0, 0], z) \
        + p['b2'][None, :, None, None]
    z = bn(z, p['bn2_gamma'], p['bn2_beta'], p['bn2_mean'], p['bn2_var'])
    att = 1.0 + jnp.tanh(z)
    return x * att + y * (2.0 - att)


# --------------------------------------------------------------------------
if __name__ == "__main__":
    key = jax.random.PRNGKey(0)
    kp, kx, ky, kx2, ky2 = jax.random.split(key, 5)

    channels, r = 64, 4                      # AFF defaults -> inter = 16
    params = make_aff_params(kp, channels, r)
    folded = fold_aff_params(params)
    run = jax.jit(aff_pallas)

    # Case 1: lane-aligned spatial size (H*W = 128); batch-blocked tile.
    x = jax.random.normal(kx, (2, channels, 8, 16), dtype=jnp.float32)
    ds_y = jax.random.normal(ky, (2, channels, 8, 16), dtype=jnp.float32)
    out = run(folded, x, ds_y)
    jax.block_until_ready(out)
    ref = aff_reference(params, x, ds_y)
    assert out.shape == x.shape
    assert bool(jnp.all(jnp.isfinite(out)))
    err = float(jnp.max(jnp.abs(out - ref)))
    assert err < 2e-2, f"mismatch vs reference (aligned): {err}"

    # Case 2: ragged spatial size (H*W = 189, not a multiple of 128) --
    # exercises the no-pad path (masked tail block instead of jnp.pad + slice).
    x2 = jax.random.normal(kx2, (3, channels, 9, 21), dtype=jnp.float32)
    y2 = jax.random.normal(ky2, (3, channels, 9, 21), dtype=jnp.float32)
    out2 = run(folded, x2, y2)
    jax.block_until_ready(out2)
    ref2 = aff_reference(params, x2, y2)
    assert out2.shape == x2.shape
    assert bool(jnp.all(jnp.isfinite(out2)))
    err2 = float(jnp.max(jnp.abs(out2 - ref2)))
    assert err2 < 2e-2, f"mismatch vs reference (ragged): {err2}"

    print("KERNEL_OK")
</pallas_src>

<mosaic_0001>
module attributes {stable_mosaic.version = 11 : i64} {
  func.func @_aff_kernel(%arg0: i32, %arg1: i32, %arg2: memref<2x64x128xf32, #tpu.memory_space<vmem>>, %arg3: memref<2x64x128xf32, #tpu.memory_space<vmem>>, %arg4: memref<16x64xf32, #tpu.memory_space<vmem>>, %arg5: memref<16x64xf32, #tpu.memory_space<vmem>>, %arg6: memref<16x1xf32, #tpu.memory_space<vmem>>, %arg7: memref<64x16xf32, #tpu.memory_space<vmem>>, %arg8: memref<64x1xf32, #tpu.memory_space<vmem>>, %arg9: memref<2x64x128xf32, #tpu.memory_space<vmem>>) attributes {dimension_semantics = [#tpu.dimension_semantics<parallel>, #tpu.dimension_semantics<parallel>], iteration_bounds = array<i64: 1, 1>, scalar_prefetch = 0 : i64, scratch_operands = 0 : i64, tpu.core_type = #tpu.core_type<tc>, window_params = [{transform_indices = @transform_0, window_bounds = array<i64: 2, 64, 128>}, {transform_indices = @transform_1, window_bounds = array<i64: 2, 64, 128>}, {pipeline_mode = #tpu.pipeline_mode<synchronous>, transform_indices = @transform_2, window_bounds = array<i64: 16, 64>}, {pipeline_mode = #tpu.pipeline_mode<synchronous>, transform_indices = @transform_3, window_bounds = array<i64: 16, 64>}, {pipeline_mode = #tpu.pipeline_mode<synchronous>, transform_indices = @transform_4, window_bounds = array<i64: 16, 1>}, {pipeline_mode = #tpu.pipeline_mode<synchronous>, transform_indices = @transform_5, window_bounds = array<i64: 64, 16>}, {pipeline_mode = #tpu.pipeline_mode<synchronous>, transform_indices = @transform_6, window_bounds = array<i64: 64, 1>}, {transform_indices = @transform_7, window_bounds = array<i64: 2, 64, 128>}]} {
    %c0 = arith.constant 0 : index
    %c0_0 = arith.constant 0 : index
    %0 = vector.load %arg4[%c0, %c0_0] : memref<16x64xf32, #tpu.memory_space<vmem>>, vector<16x64xf32>
    %c0_1 = arith.constant 0 : index
    %c0_2 = arith.constant 0 : index
    %1 = vector.load %arg5[%c0_1, %c0_2] : memref<16x64xf32, #tpu.memory_space<vmem>>, vector<16x64xf32>
    %c0_3 = arith.constant 0 : index
    %c0_4 = arith.constant 0 : index
    %2 = vector.load %arg6[%c0_3, %c0_4] : memref<16x1xf32, #tpu.memory_space<vmem>>, vector<16x1xf32>
    %c0_5 = arith.constant 0 : index
    %c0_6 = arith.constant 0 : index
    %3 = vector.load %arg7[%c0_5, %c0_6] : memref<64x16xf32, #tpu.memory_space<vmem>>, vector<64x16xf32>
    %c0_7 = arith.constant 0 : index
    %c0_8 = arith.constant 0 : index
    %4 = vector.load %arg8[%c0_7, %c0_8] : memref<64x1xf32, #tpu.memory_space<vmem>>, vector<64x1xf32>
    %c0_9 = arith.constant 0 : index
    %c0_10 = arith.constant 0 : index
    %c0_11 = arith.constant 0 : index
    %5 = vector.load %arg2[%c0_9, %c0_10, %c0_11] : memref<2x64x128xf32, #tpu.memory_space<vmem>>, vector<1x64x128xf32>
    %6 = vector.shape_cast %5 : vector<1x64x128xf32> to vector<64x128xf32>
    %c0_12 = arith.constant 0 : index
    %c0_13 = arith.constant 0 : index
    %c0_14 = arith.constant 0 : index
    %7 = vector.load %arg3[%c0_12, %c0_13, %c0_14] : memref<2x64x128xf32, #tpu.memory_space<vmem>>, vector<1x64x128xf32>
    %8 = vector.shape_cast %7 : vector<1x64x128xf32> to vector<64x128xf32>
    %cst = arith.constant dense<0.000000e+00> : vector<16x128xf32>
    %9 = tpu.matmul %0, %6, %cst {dimension_numbers = #tpu.dot_dimension_numbers<[1], [0], [0], [1], [0, 0, 1, 1], [], []>} : vector<16x64xf32>, vector<64x128xf32>, vector<16x128xf32> -> vector<16x128xf32>
    %cst_15 = arith.constant dense<0.000000e+00> : vector<16x128xf32>
    %10 = tpu.matmul %1, %8, %cst_15 {dimension_numbers = #tpu.dot_dimension_numbers<[1], [0], [0], [1], [0, 0, 1, 1], [], []>} : vector<16x64xf32>, vector<64x128xf32>, vector<16x128xf32> -> vector<16x128xf32>
    %11 = arith.addf %9, %10 : vector<16x128xf32>
    %12 = vector.broadcast %2 : vector<16x1xf32> to vector<16x128xf32>
    %13 = arith.addf %11, %12 : vector<16x128xf32>
    %cst_16 = arith.constant 0.000000e+00 : f32
    %14 = vector.broadcast %cst_16 : f32 to vector<16x128xf32>
    %15 = arith.subf %14, %13 : vector<16x128xf32>
    %16 = math.exp %15 : vector<16x128xf32>
    %cst_17 = arith.constant 1.000000e+00 : f32
    %17 = vector.broadcast %cst_17 : f32 to vector<16x128xf32>
    %18 = arith.addf %17, %16 : vector<16x128xf32>
    %19 = tpu.reciprocal %18 {approx = true} : vector<16x128xf32> -> vector<16x128xf32>
    %20 = arith.mulf %13, %19 : vector<16x128xf32>
    %cst_18 = arith.constant dense<0.000000e+00> : vector<64x128xf32>
    %21 = tpu.matmul %3, %20, %cst_18 {dimension_numbers = #tpu.dot_dimension_numbers<[1], [0], [0], [1], [0, 0, 1, 1], [], []>} : vector<64x16xf32>, vector<16x128xf32>, vector<64x128xf32> -> vector<64x128xf32>
    %22 = vector.broadcast %4 : vector<64x1xf32> to vector<64x128xf32>
    %23 = arith.addf %21, %22 : vector<64x128xf32>
    %24 = math.tanh %23 : vector<64x128xf32>
    %cst_19 = arith.constant 1.000000e+00 : f32
    %25 = vector.broadcast %cst_19 : f32 to vector<64x128xf32>
    %26 = arith.addf %25, %24 : vector<64x128xf32>
    %cst_20 = arith.constant 2.000000e+00 : f32
    %27 = vector.broadcast %cst_20 : f32 to vector<64x128xf32>
    %28 = arith.mulf %8, %27 : vector<64x128xf32>
    %29 = arith.subf %6, %8 : vector<64x128xf32>
    %30 = arith.mulf %26, %29 : vector<64x128xf32>
    %31 = arith.addf %28, %30 : vector<64x128xf32>
    %c0_21 = arith.constant 0 : index
    %c0_22 = arith.constant 0 : index
    %c0_23 = arith.constant 0 : index
    %32 = vector.load %arg9[%c0_21, %c0_22, %c0_23] : memref<2x64x128xf32, #tpu.memory_space<vmem>>, vector<1x64x128xf32>
    %33 = vector.shape_cast %32 : vector<1x64x128xf32> to vector<64x128xf32>
    %34 = vector.shape_cast %31 : vector<64x128xf32> to vector<1x64x128xf32>
    tpu.vector_store %arg9[%c0_21, %c0_22, %c0_23], %34 {strides = array<i32>} : memref<2x64x128xf32, #tpu.memory_space<vmem>>, vector<1x64x128xf32>,
    %c1 = arith.constant 1 : index
    %c0_24 = arith.constant 0 : index
    %c0_25 = arith.constant 0 : index
    %35 = vector.load %arg2[%c1, %c0_24, %c0_25] : memref<2x64x128xf32, #tpu.memory_space<vmem>>, vector<1x64x128xf32>
    %36 = vector.shape_cast %35 : vector<1x64x128xf32> to vector<64x128xf32>
    %c1_26 = arith.constant 1 : index
    %c0_27 = arith.constant 0 : index
    %c0_28 = arith.constant 0 : index
    %37 = vector.load %arg3[%c1_26, %c0_27, %c0_28] : memref<2x64x128xf32, #tpu.memory_space<vmem>>, vector<1x64x128xf32>
    %38 = vector.shape_cast %37 : vector<1x64x128xf32> to vector<64x128xf32>
    %cst_29 = arith.constant dense<0.000000e+00> : vector<16x128xf32>
    %39 = tpu.matmul %0, %36, %cst_29 {dimension_numbers = #tpu.dot_dimension_numbers<[1], [0], [0], [1], [0, 0, 1, 1], [], []>} : vector<16x64xf32>, vector<64x128xf32>, vector<16x128xf32> -> vector<16x128xf32>
    %cst_30 = arith.constant dense<0.000000e+00> : vector<16x128xf32>
    %40 = tpu.matmul %1, %38, %cst_30 {dimension_numbers = #tpu.dot_dimension_numbers<[1], [0], [0], [1], [0, 0, 1, 1], [], []>} : vector<16x64xf32>, vector<64x128xf32>, vector<16x128xf32> -> vector<16x128xf32>
    %41 = arith.addf %39, %40 : vector<16x128xf32>
    %42 = vector.broadcast %2 : vector<16x1xf32> to vector<16x128xf32>
    %43 = arith.addf %41, %42 : vector<16x128xf32>
    %cst_31 = arith.constant 0.000000e+00 : f32
    %44 = vector.broadcast %cst_31 : f32 to vector<16x128xf32>
    %45 = arith.subf %44, %43 : vector<16x128xf32>
    %46 = math.exp %45 : vector<16x128xf32>
    %cst_32 = arith.constant 1.000000e+00 : f32
    %47 = vector.broadcast %cst_32 : f32 to vector<16x128xf32>
    %48 = arith.addf %47, %46 : vector<16x128xf32>
    %49 = tpu.reciprocal %48 {approx = true} : vector<16x128xf32> -> vector<16x128xf32>
    %50 = arith.mulf %43, %49 : vector<16x128xf32>
    %cst_33 = arith.constant dense<0.000000e+00> : vector<64x128xf32>
    %51 = tpu.matmul %3, %50, %cst_33 {dimension_numbers = #tpu.dot_dimension_numbers<[1], [0], [0], [1], [0, 0, 1, 1], [], []>} : vector<64x16xf32>, vector<16x128xf32>, vector<64x128xf32> -> vector<64x128xf32>
    %52 = vector.broadcast %4 : vector<64x1xf32> to vector<64x128xf32>
    %53 = arith.addf %51, %52 : vector<64x128xf32>
    %54 = math.tanh %53 : vector<64x128xf32>
    %cst_34 = arith.constant 1.000000e+00 : f32
    %55 = vector.broadcast %cst_34 : f32 to vector<64x128xf32>
    %56 = arith.addf %55, %54 : vector<64x128xf32>
    %cst_35 = arith.constant 2.000000e+00 : f32
    %57 = vector.broadcast %cst_35 : f32 to vector<64x128xf32>
    %58 = arith.mulf %38, %57 : vector<64x128xf32>
    %59 = arith.subf %36, %38 : vector<64x128xf32>
    %60 = arith.mulf %56, %59 : vector<64x128xf32>
    %61 = arith.addf %58, %60 : vector<64x128xf32>
    %c1_36 = arith.constant 1 : index
    %c0_37 = arith.constant 0 : index
    %c0_38 = arith.constant 0 : index
    %62 = vector.load %arg9[%c1_36, %c0_37, %c0_38] : memref<2x64x128xf32, #tpu.memory_space<vmem>>, vector<1x64x128xf32>
    %63 = vector.shape_cast %62 : vector<1x64x128xf32> to vector<64x128xf32>
    %64 = vector.shape_cast %61 : vector<64x128xf32> to vector<1x64x128xf32>
    tpu.vector_store %arg9[%c1_36, %c0_37, %c0_38], %64 {strides = array<i32>} : memref<2x64x128xf32, #tpu.memory_space<vmem>>, vector<1x64x128xf32>,
    return
  }
  func.func @transform_0(%arg0: i32, %arg1: i32) -> (i32, i32, i32) {
    %c0_i32 = arith.constant 0 : i32
    %c0_i32_0 = arith.constant 0 : i32
    return %arg0, %c0_i32, %arg1 : i32, i32, i32
  }
  func.func @transform_1(%arg0: i32, %arg1: i32) -> (i32, i32, i32) {
    %c0_i32 = arith.constant 0 : i32
    %c0_i32_0 = arith.constant 0 : i32
    return %arg0, %c0_i32, %arg1 : i32, i32, i32
  }
  func.func @transform_2(%arg0: i32, %arg1: i32) -> (i32, i32) {
    %c0_i32 = arith.constant 0 : i32
    %c0_i32_0 = arith.constant 0 : i32
    %c0_i32_1 = arith.constant 0 : i32
    return %c0_i32, %c0_i32_0 : i32, i32
  }
  func.func @transform_3(%arg0: i32, %arg1: i32) -> (i32, i32) {
    %c0_i32 = arith.constant 0 : i32
    %c0_i32_0 = arith.constant 0 : i32
    %c0_i32_1 = arith.constant 0 : i32
    return %c0_i32, %c0_i32_0 : i32, i32
  }
  func.func @transform_4(%arg0: i32, %arg1: i32) -> (i32, i32) {
    %c0_i32 = arith.constant 0 : i32
    %c0_i32_0 = arith.constant 0 : i32
    %c0_i32_1 = arith.constant 0 : i32
    return %c0_i32, %c0_i32_0 : i32, i32
  }
  func.func @transform_5(%arg0: i32, %arg1: i32) -> (i32, i32) {
    %c0_i32 = arith.constant 0 : i32
    %c0_i32_0 = arith.constant 0 : i32
    %c0_i32_1 = arith.constant 0 : i32
    return %c0_i32, %c0_i32_0 : i32, i32
  }
  func.func @transform_6(%arg0: i32, %arg1: i32) -> (i32, i32) {
    %c0_i32 = arith.constant 0 : i32
    %c0_i32_0 = arith.constant 0 : i32
    %c0_i32_1 = arith.constant 0 : i32
    return %c0_i32, %c0_i32_0 : i32, i32
  }
  func.func @transform_7(%arg0: i32, %arg1: i32) -> (i32, i32, i32) {
    %c0_i32 = arith.constant 0 : i32
    %c0_i32_0 = arith.constant 0 : i32
    return %arg0, %c0_i32, %arg1 : i32, i32, i32
  }
}

</mosaic_0001>

<llo_original>
// kernel: aff_pallas.1
$region0: #{aff_pallas.1}
  #allocation0 [shape = 'u32[]', space=smem, size = 0x4, offset = 0x4, fixed_abs, tag = 'smem constant byte address 0x4 - core index']
  #allocation1 [shape = 'u32[144,128]{1,0:T(1,128)}', space=vmem, size = 0x12000, scoped, tag = 'internal scratch']
  %s0 = inlined_call_operand.vmem [shape: f32[2,64,128], index: 0, kind: input, shape index: {}]
  %s1 = inlined_call_operand.vmem [shape: f32[2,64,128], index: 1, kind: input, shape index: {}]
  %s2 = inlined_call_operand.vmem [shape: f32[16,64], index: 2, kind: input, shape index: {}]
  %s3 = inlined_call_operand.vmem [shape: f32[16,64], index: 3, kind: input, shape index: {}]
  %s4 = inlined_call_operand.vmem [shape: f32[16,1], index: 4, kind: input, shape index: {}]
  %s5 = inlined_call_operand.vmem [shape: f32[64,16], index: 5, kind: input, shape index: {}]
  %s6 = inlined_call_operand.vmem [shape: f32[64,1], index: 6, kind: input, shape index: {}]
  %s7 = inlined_call_operand.vmem [shape: f32[2,64,128], index: 7, kind: output, shape index: {}]
  %s8 = sld [smem:[#allocation0]]
  $region38: #{aff_pallas.1} parent=0
    _
  %s10 = ssub.s32 1, %s8
  %s11 = scalar_select 0, %s10, %s8
  // Predicated region
  $region2: #{aff_pallas.1} parent=0 // pred_check
    _
  $region3: #{aff_pallas.1} parent=0 // pred_check_branch
    %13 = sbr.rel (0) target = $region5
  $region4: #{aff_pallas.1} parent=0 // pred_region
    _
  $region5: #{aff_pallas.1} parent=0 // pred_fallthru
    _
  // Predicated region
  $region6: #{aff_pallas.1} parent=0 // pred_check
    _
  $region7: #{aff_pallas.1} parent=0 // pred_check_branch
    %15 = sbr.rel (0) target = $region9
  $region8: #{aff_pallas.1} parent=0 // pred_region
    _
  $region9: #{aff_pallas.1} parent=0 // pred_fallthru
    _
  // Predicated region
  $region10: #{aff_pallas.1} parent=0 // pred_check
    _
  $region11: #{aff_pallas.1} parent=0 // pred_check_branch
    %17 = sbr.rel (0) target = $region13
  $region12: #{aff_pallas.1} parent=0 // pred_region
    _
  $region13: #{aff_pallas.1} parent=0 // pred_fallthru
    _
  // Predicated region
  $region14: #{aff_pallas.1} parent=0 // pred_check
    _
  $region15: #{aff_pallas.1} parent=0 // pred_check_branch
    %19 = sbr.rel (0) target = $region17
  $region16: #{aff_pallas.1} parent=0 // pred_region
    _
  $region17: #{aff_pallas.1} parent=0 // pred_fallthru
    _
  // Predicated region
  $region18: #{aff_pallas.1} parent=0 // pred_check
    _
  $region19: #{aff_pallas.1} parent=0 // pred_check_branch
    %21 = sbr.rel (0) target = $region21
  $region20: #{aff_pallas.1} parent=0 // pred_region
    _
  $region21: #{aff_pallas.1} parent=0 // pred_fallthru
    _
  // Predicated region
  $region22: #{aff_pallas.1} parent=0 // pred_check
    _
  $region23: #{aff_pallas.1} parent=0 // pred_check_branch
    %23 = sbr.rel (0) target = $region25
  $region24: #{aff_pallas.1} parent=0 // pred_region
    _
  $region25: #{aff_pallas.1} parent=0 // pred_fallthru
    _
  // Predicated region
  $region26: #{aff_pallas.1} parent=0 // pred_check
    _
  $region27: #{aff_pallas.1} parent=0 // pred_check_branch
    %25 = sbr.rel (0) target = $region29
  $region28: #{aff_pallas.1} parent=0 // pred_region
    _
  $region29: #{aff_pallas.1} parent=0 // pred_fallthru
    _
  %v26 = vld [vmem:[%s2] sm:$0xff]
  %v27 = vld [vmem:[%s2 + $0x8] sm:$0xff]
  %v28 = vld [vmem:[%s3] sm:$0xff]
  %v29 = vld [vmem:[%s3 + $0x8] sm:$0xff]
  %v30 = vld [vmem:[%s4] sm:$0xff]
  %v31 = vld [vmem:[%s4 + $0x8] sm:$0xff]
  %v32 = vld [vmem:[%s5] sm:$0xff]
  %v33 = vld [vmem:[%s5 + $0x8] sm:$0xff]
  %v34 = vld [vmem:[%s5 + $0x10] sm:$0xff]
  %v35 = vld [vmem:[%s5 + $0x18] sm:$0xff]
  %v36 = vld [vmem:[%s5 + $0x20] sm:$0xff]
  %v37 = vld [vmem:[%s5 + $0x28] sm:$0xff]
  %v38 = vld [vmem:[%s5 + $0x30] sm:$0xff]
  %v39 = vld [vmem:[%s5 + $0x38] sm:$0xff]
  %v40 = vld [vmem:[%s6] sm:$0xff]
  %v41 = vld [vmem:[%s6 + $0x8] sm:$0xff]
  %v42 = vld [vmem:[%s6 + $0x10] sm:$0xff]
  %v43 = vld [vmem:[%s6 + $0x18] sm:$0xff]
  %v44 = vld [vmem:[%s6 + $0x20] sm:$0xff]
  %v45 = vld [vmem:[%s6 + $0x28] sm:$0xff]
  %v46 = vld [vmem:[%s6 + $0x30] sm:$0xff]
  %v47 = vld [vmem:[%s6 + $0x38] sm:$0xff]
  %v48 = vld [vmem:[%s0] sm:$0xff]
  %v49 = vld [vmem:[%s0 + $0x8] sm:$0xff]
  %v50 = vld [vmem:[%s0 + $0x10] sm:$0xff]
  %v51 = vld [vmem:[%s0 + $0x18] sm:$0xff]
  %v52 = vld [vmem:[%s0 + $0x20] sm:$0xff]
  %v53 = vld [vmem:[%s0 + $0x28] sm:$0xff]
  %v54 = vld [vmem:[%s0 + $0x30] sm:$0xff]
  %v55 = vld [vmem:[%s0 + $0x38] sm:$0xff]
  %v56 = vld [vmem:[%s1] sm:$0xff]
  %v57 = vld [vmem:[%s1 + $0x8] sm:$0xff]
  %v58 = vld [vmem:[%s1 + $0x10] sm:$0xff]
  %v59 = vld [vmem:[%s1 + $0x18] sm:$0xff]
  %v60 = vld [vmem:[%s1 + $0x20] sm:$0xff]
  %v61 = vld [vmem:[%s1 + $0x28] sm:$0xff]
  %v62 = vld [vmem:[%s1 + $0x30] sm:$0xff]
  %v63 = vld [vmem:[%s1 + $0x38] sm:$0xff]
  %vm64 = vcmask 523264
  %v66 = vsel %vm64, %v28, 0
  %v69 = vsel %vm64, %v29, 0
  %71 = vmatprep.subr.mxu0 0.0
  %72 = vmatpush1.msra.mxu0 0.0
  %73 = vmatprep.subr.mxu0 0.0
  %74 = vmatpush1.msra.mxu0 0.0
  %75 = vmatprep.subr.mxu0 0.0
  %76 = vmatpush1.msra.mxu0 0.0
  %77 = vmatprep.subr.mxu0 0.0
  %78 = vmatpush1.msra.mxu0 0.0
  %79 = vmatprep.subr.mxu0 0.0
  %80 = vmatpush1.msra.mxu0 0.0
  %81 = vmatprep.subr.mxu0 0.0
  %82 = vmatpush1.msra.mxu0 0.0
  %83 = vmatprep.subr.mxu0 0.0
  %84 = vmatpush1.msra.mxu0 0.0
  %85 = vmatprep.subr.mxu0 0.0
  %86 = vmatpush1.msra.mxu0 0.0
  %87 = vmatprep.subr.mxu0 0.0
  %88 = vmatpush1.msra.mxu0 %v63
  %89 = vmatprep.subr.mxu0 0.0
  %90 = vmatpush1.msra.mxu0 %v62
  %91 = vmatprep.subr.mxu0 0.0
  %92 = vmatpush1.msra.mxu0 %v61
  %93 = vmatprep.subr.mxu0 0.0
  %94 = vmatpush1.msra.mxu0 %v60
  %95 = vmatprep.subr.mxu0 0.0
  %96 = vmatpush1.msra.mxu0 %v59
  %97 = vmatprep.subr.mxu0 0.0
  %98 = vmatpush1.msra.mxu0 %v58
  %99 = vmatprep.subr.mxu0 0.0
  %100 = vmatpush1.msra.mxu0 %v57
  %101 = vmatprep.subr.mxu0 0.0
  %102 = vmatpush1.msra.mxu0 %v56
  %103 = vmatprep.subr.mxu0 0.0
  %104 = vmatpush2.msra.mxu0 0.0
  %105 = vmatprep.subr.mxu0 0.0
  %106 = vmatpush2.msra.mxu0 0.0
  %107 = vmatprep.subr.mxu0 0.0
  %108 = vmatpush2.msra.mxu0 0.0
  %109 = vmatprep.subr.mxu0 0.0
  %110 = vmatpush2.msra.mxu0 0.0
  %111 = vmatprep.subr.mxu0 0.0
  %112 = vmatpush2.msra.mxu0 0.0
  %113 = vmatprep.subr.mxu0 0.0
  %114 = vmatpush2.msra.mxu0 0.0
  %115 = vmatprep.subr.mxu0 0.0
  %116 = vmatpush2.msra.mxu0 0.0
  %117 = vmatprep.subr.mxu0 0.0
  %118 = vmatpush2.msra.mxu0 0.0
  %119 = vmatprep.subr.mxu0 0.0
  %120 = vmatpush2.msra.mxu0 0.0
  %121 = vmatprep.subr.mxu0 0.0
  %122 = vmatpush2.msra.mxu0 0.0
  %123 = vmatprep.subr.mxu0 0.0
  %124 = vmatpush2.msra.mxu0 0.0
  %125 = vmatprep.subr.mxu0 0.0
  %126 = vmatpush2.msra.mxu0 0.0
  %127 = vmatprep.subr.mxu0 0.0
  %128 = vmatpush2.msra.mxu0 0.0
  %129 = vmatprep.subr.mxu0 0.0
  %130 = vmatpush2.msra.mxu0 0.0
  %131 = vmatprep.subr.mxu0 0.0
  %132 = vmatpush2.msra.mxu0 0.0
  %133 = vmatprep.subr.mxu0 0.0
  %134 = vmatpush2.msra.mxu0 0.0
  %135 = vmatprep.mubr.f32.mxu0 0.0
  %136 = vmatmul.mubr.f32.gmra.mxu0 %v66
  %v137 = vpop.f32.mrf.mxu0
  %v138 = vadd.f32 0.0, %v137
  %v139 = vpop.f32.mrf.mxu0
  %140 = vmatprep.mubr.f32.mxu0 0.0
  %141 = vmatmul.mubr.f32.gmra.mxu0 %v69
  %v142 = vpop.f32.mrf.mxu0
  %v143 = vadd.f32 0.0, %v142
  %v144 = vpop.f32.mrf.mxu0
  %145 = vdwg.mxu0
  %v147 = vsel %vm64, %v26, 0
  %v150 = vsel %vm64, %v27, 0
  %152 = vmatprep.subr.mxu0 0.0
  %153 = vmatpush1.msra.mxu0 0.0
  %154 = vmatprep.subr.mxu0 0.0
  %155 = vmatpush1.msra.mxu0 0.0
  %156 = vmatprep.subr.mxu0 0.0
  %157 = vmatpush1.msra.mxu0 0.0
  %158 = vmatprep.subr.mxu0 0.0
  %159 = vmatpush1.msra.mxu0 0.0
  %160 = vmatprep.subr.mxu0 0.0
  %161 = vmatpush1.msra.mxu0 0.0
  %162 = vmatprep.subr.mxu0 0.0
  %163 = vmatpush1.msra.mxu0 0.0
  %164 = vmatprep.subr.mxu0 0.0
  %165 = vmatpush1.msra.mxu0 0.0
  %166 = vmatprep.subr.mxu0 0.0
  %167 = vmatpush1.msra.mxu0 0.0
  %168 = vmatprep.subr.mxu0 0.0
  %169 = vmatpush1.msra.mxu0 %v55
  %170 = vmatprep.subr.mxu0 0.0
  %171 = vmatpush1.msra.mxu0 %v54
  %172 = vmatprep.subr.mxu0 0.0
  %173 = vmatpush1.msra.mxu0 %v53
  %174 = vmatprep.subr.mxu0 0.0
  %175 = vmatpush1.msra.mxu0 %v52
  %176 = vmatprep.subr.mxu0 0.0
  %177 = vmatpush1.msra.mxu0 %v51
  %178 = vmatprep.subr.mxu0 0.0
  %179 = vmatpush1.msra.mxu0 %v50
  %180 = vmatprep.subr.mxu0 0.0
  %181 = vmatpush1.msra.mxu0 %v49
  %182 = vmatprep.subr.mxu0 0.0
  %183 = vmatpush1.msra.mxu0 %v48
  %184 = vmatprep.subr.mxu0 0.0
  %185 = vmatpush2.msra.mxu0 0.0
  %186 = vmatprep.subr.mxu0 0.0
  %187 = vmatpush2.msra.mxu0 0.0
  %188 = vmatprep.subr.mxu0 0.0
  %189 = vmatpush2.msra.mxu0 0.0
  %190 = vmatprep.subr.mxu0 0.0
  %191 = vmatpush2.msra.mxu0 0.0
  %192 = vmatprep.subr.mxu0 0.0
  %193 = vmatpush2.msra.mxu0 0.0
  %194 = vmatprep.subr.mxu0 0.0
  %195 = vmatpush2.msra.mxu0 0.0
  %196 = vmatprep.subr.mxu0 0.0
  %197 = vmatpush2.msra.mxu0 0.0
  %198 = vmatprep.subr.mxu0 0.0
  %199 = vmatpush2.msra.mxu0 0.0
  %200 = vmatprep.subr.mxu0 0.0
  %201 = vmatpush2.msra.mxu0 0.0
  %202 = vmatprep.subr.mxu0 0.0
  %203 = vmatpush2.msra.mxu0 0.0
  %204 = vmatprep.subr.mxu0 0.0
  %205 = vmatpush2.msra.mxu0 0.0
  %206 = vmatprep.subr.mxu0 0.0
  %207 = vmatpush2.msra.mxu0 0.0
  %208 = vmatprep.subr.mxu0 0.0
  %209 = vmatpush2.msra.mxu0 0.0
  %210 = vmatprep.subr.mxu0 0.0
  %211 = vmatpush2.msra.mxu0 0.0
  %212 = vmatprep.subr.mxu0 0.0
  %213 = vmatpush2.msra.mxu0 0.0
  %214 = vmatprep.subr.mxu0 0.0
  %215 = vmatpush2.msra.mxu0 0.0
  %216 = vmatprep.mubr.f32.mxu0 0.0
  %217 = vmatmul.mubr.f32.gmra.mxu0 %v147
  %v218 = vpop.f32.mrf.mxu0
  %v219 = vadd.f32 %v138, %v218
  %v220 = vpop.f32.mrf.mxu0
  %221 = vmatprep.mubr.f32.mxu0 0.0
  %222 = vmatmul.mubr.f32.gmra.mxu0 %v150
  %v223 = vpop.f32.mrf.mxu0
  %v224 = vadd.f32 %v143, %v223
  %v225 = vpop.f32.mrf.mxu0
  %226 = vdwg.mxu0
  %228 = vset.pattern.permute.xlu0 0
  %229 = vperm.xlu0 %228, %v30
  %v230 = vpop.permute.xlu0 %229
  %233 = vset.pattern.permute.xlu0 0
  %234 = vperm.xlu0 %233, %v31
  %v235 = vpop.permute.xlu0 %234
  %v237 = vadd.f32 %v219, %v230
  %v238 = vadd.f32 %v224, %v235
  %v239 = vsub.f32 0.0, %v237
  %v240 = vsub.f32 0.0, %v238
  %v241 = vmul.f32 %v239, 1.442695
  %v242 = vpow.pop %v241
  %v243 = vmul.f32 %v240, 1.442695
  %v244 = vpow.pop %v243
  %v245 = vadd.f32 %v242, 1.0
  %v246 = vadd.f32 %v244, 1.0
  %v247 = vrcp.pop %v245
  %v248 = vrcp.pop %v246
  %v249 = vmul.f32 %v237, %v247
  %v250 = vmul.f32 %v238, %v248
  %252 = vset.pattern.permute.xlu0 0
  %253 = vperm.xlu0 %252, %v40
  %v254 = vpop.permute.xlu0 %253
  %257 = vset.pattern.permute.xlu0 0
  %258 = vperm.xlu0 %257, %v41
  %v259 = vpop.permute.xlu0 %258
  %262 = vset.pattern.permute.xlu0 0
  %263 = vperm.xlu0 %262, %v42
  %v264 = vpop.permute.xlu0 %263
  %267 = vset.pattern.permute.xlu0 0
  %268 = vperm.xlu0 %267, %v43
  %v269 = vpop.permute.xlu0 %268
  %272 = vset.pattern.permute.xlu0 0
  %273 = vperm.xlu0 %272, %v44
  %v274 = vpop.permute.xlu0 %273
  %277 = vset.pattern.permute.xlu0 0
  %278 = vperm.xlu0 %277, %v45
  %v279 = vpop.permute.xlu0 %278
  %282 = vset.pattern.permute.xlu0 0
  %283 = vperm.xlu0 %282, %v46
  %v284 = vpop.permute.xlu0 %283
  %287 = vset.pattern.permute.xlu0 0
  %288 = vperm.xlu0 %287, %v47
  %v289 = vpop.permute.xlu0 %288
  %vm291 = vcmask 130048
  %v293 = vsel %vm291, %v32, 0
  %v296 = vsel %vm291, %v33, 0
  %v299 = vsel %vm291, %v34, 0
  %v302 = vsel %vm291, %v35, 0
  %v305 = vsel %vm291, %v36, 0
  %v308 = vsel %vm291, %v37, 0
  %v311 = vsel %vm291, %v38, 0
  %v314 = vsel %vm291, %v39, 0
  %316 = vmatprep.subr.mxu0 0.0
  %317 = vmatpush1.msra.mxu0 0.0
  %318 = vmatprep.subr.mxu0 0.0
  %319 = vmatpush1.msra.mxu0 0.0
  %320 = vmatprep.subr.mxu0 0.0
  %321 = vmatpush1.msra.mxu0 0.0
  %322 = vmatprep.subr.mxu0 0.0
  %323 = vmatpush1.msra.mxu0 0.0
  %324 = vmatprep.subr.mxu0 0.0
  %325 = vmatpush1.msra.mxu0 0.0
  %326 = vmatprep.subr.mxu0 0.0
  %327 = vmatpush1.msra.mxu0 0.0
  %328 = vmatprep.subr.mxu0 0.0
  %329 = vmatpush1.msra.mxu0 0.0
  %330 = vmatprep.subr.mxu0 0.0
  %331 = vmatpush1.msra.mxu0 0.0
  %332 = vmatprep.subr.mxu0 0.0
  %333 = vmatpush1.msra.mxu0 0.0
  %334 = vmatprep.subr.mxu0 0.0
  %335 = vmatpush1.msra.mxu0 0.0
  %336 = vmatprep.subr.mxu0 0.0
  %337 = vmatpush1.msra.mxu0 0.0
  %338 = vmatprep.subr.mxu0 0.0
  %339 = vmatpush1.msra.mxu0 0.0
  %340 = vmatprep.subr.mxu0 0.0
  %341 = vmatpush1.msra.mxu0 0.0
  %342 = vmatprep.subr.mxu0 0.0
  %343 = vmatpush1.msra.mxu0 0.0
  %344 = vmatprep.subr.mxu0 0.0
  %345 = vmatpush1.msra.mxu0 %v250
  %346 = vmatprep.subr.mxu0 0.0
  %347 = vmatpush1.msra.mxu0 %v249
  %348 = vmatprep.subr.mxu0 0.0
  %349 = vmatpush2.msra.mxu0 0.0
  %350 = vmatprep.subr.mxu0 0.0
  %351 = vmatpush2.msra.mxu0 0.0
  %352 = vmatprep.subr.mxu0 0.0
  %353 = vmatpush2.msra.mxu0 0.0
  %354 = vmatprep.subr.mxu0 0.0
  %355 = vmatpush2.msra.mxu0 0.0
  %356 = vmatprep.subr.mxu0 0.0
  %357 = vmatpush2.msra.mxu0 0.0
  %358 = vmatprep.subr.mxu0 0.0
  %359 = vmatpush2.msra.mxu0 0.0
  %360 = vmatprep.subr.mxu0 0.0
  %361 = vmatpush2.msra.mxu0 0.0
  %362 = vmatprep.subr.mxu0 0.0
  %363 = vmatpush2.msra.mxu0 0.0
  %364 = vmatprep.subr.mxu0 0.0
  %365 = vmatpush2.msra.mxu0 0.0
  %366 = vmatprep.subr.mxu0 0.0
  %367 = vmatpush2.msra.mxu0 0.0
  %368 = vmatprep.subr.mxu0 0.0
  %369 = vmatpush2.msra.mxu0 0.0
  %370 = vmatprep.subr.mxu0 0.0
  %371 = vmatpush2.msra.mxu0 0.0
  %372 = vmatprep.subr.mxu0 0.0
  %373 = vmatpush2.msra.mxu0 0.0
  %374 = vmatprep.subr.mxu0 0.0
  %375 = vmatpush2.msra.mxu0 0.0
  %376 = vmatprep.subr.mxu0 0.0
  %377 = vmatpush2.msra.mxu0 0.0
  %378 = vmatprep.subr.mxu0 0.0
  %379 = vmatpush2.msra.mxu0 0.0
  %380 = vmatprep.mubr.f32.mxu0 0.0
  %381 = vmatmul.mubr.f32.gmra.mxu0 %v293
  %v382 = vpop.f32.mrf.mxu0
  %v383 = vadd.f32 %v254, %v382
  %v384 = vpop.f32.mrf.mxu0
  %385 = vmatprep.mubr.f32.mxu0 0.0
  %386 = vmatmul.mubr.f32.gmra.mxu0 %v296
  %v387 = vpop.f32.mrf.mxu0
  %v388 = vadd.f32 %v259, %v387
  %v389 = vpop.f32.mrf.mxu0
  %390 = vmatprep.mubr.f32.mxu0 0.0
  %391 = vmatmul.mubr.f32.gmra.mxu0 %v299
  %v392 = vpop.f32.mrf.mxu0
  %v393 = vadd.f32 %v264, %v392
  %v394 = vpop.f32.mrf.mxu0
  %395 = vmatprep.mubr.f32.mxu0 0.0
  %396 = vmatmul.mubr.f32.gmra.mxu0 %v302
  %v397 = vpop.f32.mrf.mxu0
  %v398 = vadd.f32 %v269, %v397
  %v399 = vpop.f32.mrf.mxu0
  %400 = vmatprep.mubr.f32.mxu0 0.0
  %401 = vmatmul.mubr.f32.gmra.mxu0 %v305
  %v402 = vpop.f32.mrf.mxu0
  %v403 = vadd.f32 %v274, %v402
  %v404 = vpop.f32.mrf.mxu0
  %405 = vmatprep.mubr.f32.mxu0 0.0
  %406 = vmatmul.mubr.f32.gmra.mxu0 %v308
  %v407 = vpop.f32.mrf.mxu0
  %v408 = vadd.f32 %v279, %v407
  %v409 = vpop.f32.mrf.mxu0
  %410 = vmatprep.mubr.f32.mxu0 0.0
  %411 = vmatmul.mubr.f32.gmra.mxu0 %v311
  %v412 = vpop.f32.mrf.mxu0
  %v413 = vadd.f32 %v284, %v412
  %v414 = vpop.f32.mrf.mxu0
  %415 = vmatprep.mubr.f32.mxu0 0.0
  %416 = vmatmul.mubr.f32.gmra.mxu0 %v314
  %v417 = vpop.f32.mrf.mxu0
  %v418 = vadd.f32 %v289, %v417
  %v419 = vpop.f32.mrf.mxu0
  %420 = vdwg.mxu0
  %v421 = vtanh.pop %v383
  %v422 = vtanh.pop %v388
  %v423 = vtanh.pop %v393
  %v424 = vtanh.pop %v398
  %v425 = vtanh.pop %v403
  %v426 = vtanh.pop %v408
  %v427 = vtanh.pop %v413
  %v428 = vtanh.pop %v418
  %v429 = vadd.f32 %v421, 1.0
  %v430 = vadd.f32 %v422, 1.0
  %v431 = vadd.f32 %v423, 1.0
  %v432 = vadd.f32 %v424, 1.0
  %v433 = vadd.f32 %v425, 1.0
  %v434 = vadd.f32 %v426, 1.0
  %v435 = vadd.f32 %v427, 1.0
  %v436 = vadd.f32 %v428, 1.0
  %v437 = vmul.f32 %v56, 2.0
  %v438 = vmul.f32 %v57, 2.0
  %v439 = vmul.f32 %v58, 2.0
  %v440 = vmul.f32 %v59, 2.0
  %v441 = vmul.f32 %v60, 2.0
  %v442 = vmul.f32 %v61, 2.0
  %v443 = vmul.f32 %v62, 2.0
  %v444 = vmul.f32 %v63, 2.0
  %v445 = vsub.f32 %v48, %v56
  %v446 = vsub.f32 %v49, %v57
  %v447 = vsub.f32 %v50, %v58
  %v448 = vsub.f32 %v51, %v59
  %v449 = vsub.f32 %v52, %v60
  %v450 = vsub.f32 %v53, %v61
  %v451 = vsub.f32 %v54, %v62
  %v452 = vsub.f32 %v55, %v63
  %v453 = vmul.f32 %v429, %v445
  %v454 = vmul.f32 %v430, %v446
  %v455 = vmul.f32 %v431, %v447
  %v456 = vmul.f32 %v432, %v448
  %v457 = vmul.f32 %v433, %v449
  %v458 = vmul.f32 %v434, %v450
  %v459 = vmul.f32 %v435, %v451
  %v460 = vmul.f32 %v436, %v452
  %v461 = vadd.f32 %v437, %v453
  %v462 = vadd.f32 %v438, %v454
  %v463 = vadd.f32 %v439, %v455
  %v464 = vadd.f32 %v440, %v456
  %v465 = vadd.f32 %v441, %v457
  %v466 = vadd.f32 %v442, %v458
  %v467 = vadd.f32 %v443, %v459
  %v468 = vadd.f32 %v444, %v460
  %469 = vst [vmem:[%s7] sm:$0xff] %v461
  %470 = vst [vmem:[%s7 + $0x8] sm:$0xff] %v462
  %471 = vst [vmem:[%s7 + $0x10] sm:$0xff] %v463
  %472 = vst [vmem:[%s7 + $0x18] sm:$0xff] %v464
  %473 = vst [vmem:[%s7 + $0x20] sm:$0xff] %v465
  %474 = vst [vmem:[%s7 + $0x28] sm:$0xff] %v466
  %475 = vst [vmem:[%s7 + $0x30] sm:$0xff] %v467
  %476 = vst [vmem:[%s7 + $0x38] sm:$0xff] %v468
  %s477 = scalar_lea.vmem %s0, 64
  %v478 = vld [vmem:[%s477] sm:$0xff]
  %v479 = vld [vmem:[%s477 + $0x8] sm:$0xff]
  %v480 = vld [vmem:[%s477 + $0x10] sm:$0xff]
  %v481 = vld [vmem:[%s477 + $0x18] sm:$0xff]
  %v482 = vld [vmem:[%s477 + $0x20] sm:$0xff]
  %v483 = vld [vmem:[%s477 + $0x28] sm:$0xff]
  %v484 = vld [vmem:[%s477 + $0x30] sm:$0xff]
  %v485 = vld [vmem:[%s477 + $0x38] sm:$0xff]
  %s486 = scalar_lea.vmem %s1, 64
  %v487 = vld [vmem:[%s486] sm:$0xff]
  %v488 = vld [vmem:[%s486 + $0x8] sm:$0xff]
  %v489 = vld [vmem:[%s486 + $0x10] sm:$0xff]
  %v490 = vld [vmem:[%s486 + $0x18] sm:$0xff]
  %v491 = vld [vmem:[%s486 + $0x20] sm:$0xff]
  %v492 = vld [vmem:[%s486 + $0x28] sm:$0xff]
  %v493 = vld [vmem:[%s486 + $0x30] sm:$0xff]
  %v494 = vld [vmem:[%s486 + $0x38] sm:$0xff]
  %495 = vmatprep.subr.mxu0 0.0
  %496 = vmatpush1.msra.mxu0 0.0
  %497 = vmatprep.subr.mxu0 0.0
  %498 = vmatpush1.msra.mxu0 0.0
  %499 = vmatprep.subr.mxu0 0.0
  %500 = vmatpush1.msra.mxu0 0.0
  %501 = vmatprep.subr.mxu0 0.0
  %502 = vmatpush1.msra.mxu0 0.0
  %503 = vmatprep.subr.mxu0 0.0
  %504 = vmatpush1.msra.mxu0 0.0
  %505 = vmatprep.subr.mxu0 0.0
  %506 = vmatpush1.msra.mxu0 0.0
  %507 = vmatprep.subr.mxu0 0.0
  %508 = vmatpush1.msra.mxu0 0.0
  %509 = vmatprep.subr.mxu0 0.0
  %510 = vmatpush1.msra.mxu0 0.0
  %511 = vmatprep.subr.mxu0 0.0
  %512 = vmatpush1.msra.mxu0 %v494
  %513 = vmatprep.subr.mxu0 0.0
  %514 = vmatpush1.msra.mxu0 %v493
  %515 = vmatprep.subr.mxu0 0.0
  %516 = vmatpush1.msra.mxu0 %v492
  %517 = vmatprep.subr.mxu0 0.0
  %518 = vmatpush1.msra.mxu0 %v491
  %519 = vmatprep.subr.mxu0 0.0
  %520 = vmatpush1.msra.mxu0 %v490
  %521 = vmatprep.subr.mxu0 0.0
  %522 = vmatpush1.msra.mxu0 %v489
  %523 = vmatprep.subr.mxu0 0.0
  %524 = vmatpush1.msra.mxu0 %v488
  %525 = vmatprep.subr.mxu0 0.0
  %526 = vmatpush1.msra.mxu0 %v487
  %527 = vmatprep.subr.mxu0 0.0
  %528 = vmatpush2.msra.mxu0 0.0
  %529 = vmatprep.subr.mxu0 0.0
  %530 = vmatpush2.msra.mxu0 0.0
  %531 = vmatprep.subr.mxu0 0.0
  %532 = vmatpush2.msra.mxu0 0.0
  %533 = vmatprep.subr.mxu0 0.0
  %534 = vmatpush2.msra.mxu0 0.0
  %535 = vmatprep.subr.mxu0 0.0
  %536 = vmatpush2.msra.mxu0 0.0
  %537 = vmatprep.subr.mxu0 0.0
  %538 = vmatpush2.msra.mxu0 0.0
  %539 = vmatprep.subr.mxu0 0.0
  %540 = vmatpush2.msra.mxu0 0.0
  %541 = vmatprep.subr.mxu0 0.0
  %542 = vmatpush2.msra.mxu0 0.0
  %543 = vmatprep.subr.mxu0 0.0
  %544 = vmatpush2.msra.mxu0 0.0
  %545 = vmatprep.subr.mxu0 0.0
  %546 = vmatpush2.msra.mxu0 0.0
  %547 = vmatprep.subr.mxu0 0.0
  %548 = vmatpush2.msra.mxu0 0.0
  %549 = vmatprep.subr.mxu0 0.0
  %550 = vmatpush2.msra.mxu0 0.0
  %551 = vmatprep.subr.mxu0 0.0
  %552 = vmatpush2.msra.mxu0 0.0
  %553 = vmatprep.subr.mxu0 0.0
  %554 = vmatpush2.msra.mxu0 0.0
  %555 = vmatprep.subr.mxu0 0.0
  %556 = vmatpush2.msra.mxu0 0.0
  %557 = vmatprep.subr.mxu0 0.0
  %558 = vmatpush2.msra.mxu0 0.0
  %559 = vmatprep.mubr.f32.mxu0 0.0
  %560 = vmatmul.mubr.f32.gmra.mxu0 %v66
  %v561 = vpop.f32.mrf.mxu0
  %v562 = vadd.f32 0.0, %v561
  %v563 = vpop.f32.mrf.mxu0
  %564 = vmatprep.mubr.f32.mxu0 0.0
  %565 = vmatmul.mubr.f32.gmra.mxu0 %v69
  %v566 = vpop.f32.mrf.mxu0
  %v567 = vadd.f32 0.0, %v566
  %v568 = vpop.f32.mrf.mxu0
  %569 = vdwg.mxu0
  %570 = vmatprep.subr.mxu0 0.0
  %571 = vmatpush1.msra.mxu0 0.0
  %572 = vmatprep.subr.mxu0 0.0
  %573 = vmatpush1.msra.mxu0 0.0
  %574 = vmatprep.subr.mxu0 0.0
  %575 = vmatpush1.msra.mxu0 0.0
  %576 = vmatprep.subr.mxu0 0.0
  %577 = vmatpush1.msra.mxu0 0.0
  %578 = vmatprep.subr.mxu0 0.0
  %579 = vmatpush1.msra.mxu0 0.0
  %580 = vmatprep.subr.mxu0 0.0
  %581 = vmatpush1.msra.mxu0 0.0
  %582 = vmatprep.subr.mxu0 0.0
  %583 = vmatpush1.msra.mxu0 0.0
  %584 = vmatprep.subr.mxu0 0.0
  %585 = vmatpush1.msra.mxu0 0.0
  %586 = vmatprep.subr.mxu0 0.0
  %587 = vmatpush1.msra.mxu0 %v485
  %588 = vmatprep.subr.mxu0 0.0
  %589 = vmatpush1.msra.mxu0 %v484
  %590 = vmatprep.subr.mxu0 0.0
  %591 = vmatpush1.msra.mxu0 %v483
  %592 = vmatprep.subr.mxu0 0.0
  %593 = vmatpush1.msra.mxu0 %v482
  %594 = vmatprep.subr.mxu0 0.0
  %595 = vmatpush1.msra.mxu0 %v481
  %596 = vmatprep.subr.mxu0 0.0
  %597 = vmatpush1.msra.mxu0 %v480
  %598 = vmatprep.subr.mxu0 0.0
  %599 = vmatpush1.msra.mxu0 %v479
  %600 = vmatprep.subr.mxu0 0.0
  %601 = vmatpush1.msra.mxu0 %v478
  %602 = vmatprep.subr.mxu0 0.0
  %603 = vmatpush2.msra.mxu0 0.0
  %604 = vmatprep.subr.mxu0 0.0
  %605 = vmatpush2.msra.mxu0 0.0
  %606 = vmatprep.subr.mxu0 0.0
  %607 = vmatpush2.msra.mxu0 0.0
  %608 = vmatprep.subr.mxu0 0.0
  %609 = vmatpush2.msra.mxu0 0.0
  %610 = vmatprep.subr.mxu0 0.0
  %611 = vmatpush2.msra.mxu0 0.0
  %612 = vmatprep.subr.mxu0 0.0
  %613 = vmatpush2.msra.mxu0 0.0
  %614 = vmatprep.subr.mxu0 0.0
  %615 = vmatpush2.msra.mxu0 0.0
  %616 = vmatprep.subr.mxu0 0.0
  %617 = vmatpush2.msra.mxu0 0.0
  %618 = vmatprep.subr.mxu0 0.0
  %619 = vmatpush2.msra.mxu0 0.0
  %620 = vmatprep.subr.mxu0 0.0
  %621 = vmatpush2.msra.mxu0 0.0
  %622 = vmatprep.subr.mxu0 0.0
  %623 = vmatpush2.msra.mxu0 0.0
  %624 = vmatprep.subr.mxu0 0.0
  %625 = vmatpush2.msra.mxu0 0.0
  %626 = vmatprep.subr.mxu0 0.0
  %627 = vmatpush2.msra.mxu0 0.0
  %628 = vmatprep.subr.mxu0 0.0
  %629 = vmatpush2.msra.mxu0 0.0
  %630 = vmatprep.subr.mxu0 0.0
  %631 = vmatpush2.msra.mxu0 0.0
  %632 = vmatprep.subr.mxu0 0.0
  %633 = vmatpush2.msra.mxu0 0.0
  %634 = vmatprep.mubr.f32.mxu0 0.0
  %635 = vmatmul.mubr.f32.gmra.mxu0 %v147
  %v636 = vpop.f32.mrf.mxu0
  %v637 = vadd.f32 %v562, %v636
  %v638 = vpop.f32.mrf.mxu0
  %639 = vmatprep.mubr.f32.mxu0 0.0
  %640 = vmatmul.mubr.f32.gmra.mxu0 %v150
  %v641 = vpop.f32.mrf.mxu0
  %v642 = vadd.f32 %v567, %v641
  %v643 = vpop.f32.mrf.mxu0
  %644 = vdwg.mxu0
  %v645 = vadd.f32 %v637, %v230
  %v646 = vadd.f32 %v642, %v235
  %v647 = vsub.f32 0.0, %v645
  %v648 = vsub.f32 0.0, %v646
  %v649 = vmul.f32 %v647, 1.442695
  %v650 = vpow.pop %v649
  %v651 = vmul.f32 %v648, 1.442695
  %v652 = vpow.pop %v651
  %v653 = vadd.f32 %v650, 1.0
  %v654 = vadd.f32 %v652, 1.0
  %v655 = vrcp.pop %v653
  %v656 = vrcp.pop %v654
  %v657 = vmul.f32 %v645, %v655
  %v658 = vmul.f32 %v646, %v656
  %659 = vmatprep.subr.mxu0 0.0
  %660 = vmatpush1.msra.mxu0 0.0
  %661 = vmatprep.subr.mxu0 0.0
  %662 = vmatpush1.msra.mxu0 0.0
  %663 = vmatprep.subr.mxu0 0.0
  %664 = vmatpush1.msra.mxu0 0.0
  %665 = vmatprep.subr.mxu0 0.0
  %666 = vmatpush1.msra.mxu0 0.0
  %667 = vmatprep.subr.mxu0 0.0
  %668 = vmatpush1.msra.mxu0 0.0
  %669 = vmatprep.subr.mxu0 0.0
  %670 = vmatpush1.msra.mxu0 0.0
  %671 = vmatprep.subr.mxu0 0.0
  %672 = vmatpush1.msra.mxu0 0.0
  %673 = vmatprep.subr.mxu0 0.0
  %674 = vmatpush1.msra.mxu0 0.0
  %675 = vmatprep.subr.mxu0 0.0
  %676 = vmatpush1.msra.mxu0 0.0
  %677 = vmatprep.subr.mxu0 0.0
  %678 = vmatpush1.msra.mxu0 0.0
  %679 = vmatprep.subr.mxu0 0.0
  %680 = vmatpush1.msra.mxu0 0.0
  %681 = vmatprep.subr.mxu0 0.0
  %682 = vmatpush1.msra.mxu0 0.0
  %683 = vmatprep.subr.mxu0 0.0
  %684 = vmatpush1.msra.mxu0 0.0
  %685 = vmatprep.subr.mxu0 0.0
  %686 = vmatpush1.msra.mxu0 0.0
  %687 = vmatprep.subr.mxu0 0.0
  %688 = vmatpush1.msra.mxu0 %v658
  %689 = vmatprep.subr.mxu0 0.0
  %690 = vmatpush1.msra.mxu0 %v657
  %691 = vmatprep.subr.mxu0 0.0
  %692 = vmatpush2.msra.mxu0 0.0
  %693 = vmatprep.subr.mxu0 0.0
  %694 = vmatpush2.msra.mxu0 0.0
  %695 = vmatprep.subr.mxu0 0.0
  %696 = vmatpush2.msra.mxu0 0.0
  %697 = vmatprep.subr.mxu0 0.0
  %698 = vmatpush2.msra.mxu0 0.0
  %699 = vmatprep.subr.mxu0 0.0
  %700 = vmatpush2.msra.mxu0 0.0
  %701 = vmatprep.subr.mxu0 0.0
  %702 = vmatpush2.msra.mxu0 0.0
  %703 = vmatprep.subr.mxu0 0.0
  %704 = vmatpush2.msra.mxu0 0.0
  %705 = vmatprep.subr.mxu0 0.0
  %706 = vmatpush2.msra.mxu0 0.0
  %707 = vmatprep.subr.mxu0 0.0
  %708 = vmatpush2.msra.mxu0 0.0
  %709 = vmatprep.subr.mxu0 0.0
  %710 = vmatpush2.msra.mxu0 0.0
  %711 = vmatprep.subr.mxu0 0.0
  %712 = vmatpush2.msra.mxu0 0.0
  %713 = vmatprep.subr.mxu0 0.0
  %714 = vmatpush2.msra.mxu0 0.0
  %715 = vmatprep.subr.mxu0 0.0
  %716 = vmatpush2.msra.mxu0 0.0
  %717 = vmatprep.subr.mxu0 0.0
  %718 = vmatpush2.msra.mxu0 0.0
  %719 = vmatprep.subr.mxu0 0.0
  %720 = vmatpush2.msra.mxu0 0.0
  %721 = vmatprep.subr.mxu0 0.0
  %722 = vmatpush2.msra.mxu0 0.0
  %723 = vmatprep.mubr.f32.mxu0 0.0
  %724 = vmatmul.mubr.f32.gmra.mxu0 %v293
  %v725 = vpop.f32.mrf.mxu0
  %v726 = vadd.f32 %v254, %v725
  %v727 = vpop.f32.mrf.mxu0
  %728 = vmatprep.mubr.f32.mxu0 0.0
  %729 = vmatmul.mubr.f32.gmra.mxu0 %v296
  %v730 = vpop.f32.mrf.mxu0
  %v731 = vadd.f32 %v259, %v730
  %v732 = vpop.f32.mrf.mxu0
  %733 = vmatprep.mubr.f32.mxu0 0.0
  %734 = vmatmul.mubr.f32.gmra.mxu0 %v299
  %v735 = vpop.f32.mrf.mxu0
  %v736 = vadd.f32 %v264, %v735
  %v737 = vpop.f32.mrf.mxu0
  %738 = vmatprep.mubr.f32.mxu0 0.0
  %739 = vmatmul.mubr.f32.gmra.mxu0 %v302
  %v740 = vpop.f32.mrf.mxu0
  %v741 = vadd.f32 %v269, %v740
  %v742 = vpop.f32.mrf.mxu0
  %743 = vmatprep.mubr.f32.mxu0 0.0
  %744 = vmatmul.mubr.f32.gmra.mxu0 %v305
  %v745 = vpop.f32.mrf.mxu0
  %v746 = vadd.f32 %v274, %v745
  %v747 = vpop.f32.mrf.mxu0
  %748 = vmatprep.mubr.f32.mxu0 0.0
  %749 = vmatmul.mubr.f32.gmra.mxu0 %v308
  %v750 = vpop.f32.mrf.mxu0
  %v751 = vadd.f32 %v279, %v750
  %v752 = vpop.f32.mrf.mxu0
  %753 = vmatprep.mubr.f32.mxu0 0.0
  %754 = vmatmul.mubr.f32.gmra.mxu0 %v311
  %v755 = vpop.f32.mrf.mxu0
  %v756 = vadd.f32 %v284, %v755
  %v757 = vpop.f32.mrf.mxu0
  %758 = vmatprep.mubr.f32.mxu0 0.0
  %759 = vmatmul.mubr.f32.gmra.mxu0 %v314
  %v760 = vpop.f32.mrf.mxu0
  %v761 = vadd.f32 %v289, %v760
  %v762 = vpop.f32.mrf.mxu0
  %763 = vdwg.mxu0
  %v764 = vtanh.pop %v726
  %v765 = vtanh.pop %v731
  %v766 = vtanh.pop %v736
  %v767 = vtanh.pop %v741
  %v768 = vtanh.pop %v746
  %v769 = vtanh.pop %v751
  %v770 = vtanh.pop %v756
  %v771 = vtanh.pop %v761
  %v772 = vadd.f32 %v764, 1.0
  %v773 = vadd.f32 %v765, 1.0
  %v774 = vadd.f32 %v766, 1.0
  %v775 = vadd.f32 %v767, 1.0
  %v776 = vadd.f32 %v768, 1.0
  %v777 = vadd.f32 %v769, 1.0
  %v778 = vadd.f32 %v770, 1.0
  %v779 = vadd.f32 %v771, 1.0
  %v780 = vmul.f32 %v487, 2.0
  %v781 = vmul.f32 %v488, 2.0
  %v782 = vmul.f32 %v489, 2.0
  %v783 = vmul.f32 %v490, 2.0
  %v784 = vmul.f32 %v491, 2.0
  %v785 = vmul.f32 %v492, 2.0
  %v786 = vmul.f32 %v493, 2.0
  %v787 = vmul.f32 %v494, 2.0
  %v788 = vsub.f32 %v478, %v487
  %v789 = vsub.f32 %v479, %v488
  %v790 = vsub.f32 %v480, %v489
  %v791 = vsub.f32 %v481, %v490
  %v792 = vsub.f32 %v482, %v491
  %v793 = vsub.f32 %v483, %v492
  %v794 = vsub.f32 %v484, %v493
  %v795 = vsub.f32 %v485, %v494
  %v796 = vmul.f32 %v772, %v788
  %v797 = vmul.f32 %v773, %v789
  %v798 = vmul.f32 %v774, %v790
  %v799 = vmul.f32 %v775, %v791
  %v800 = vmul.f32 %v776, %v792
  %v801 = vmul.f32 %v777, %v793
  %v802 = vmul.f32 %v778, %v794
  %v803 = vmul.f32 %v779, %v795
  %v804 = vadd.f32 %v780, %v796
  %v805 = vadd.f32 %v781, %v797
  %v806 = vadd.f32 %v782, %v798
  %v807 = vadd.f32 %v783, %v799
  %v808 = vadd.f32 %v784, %v800
  %v809 = vadd.f32 %v785, %v801
  %v810 = vadd.f32 %v786, %v802
  %v811 = vadd.f32 %v787, %v803
  %s812 = scalar_lea.vmem %s7, 64
  %813 = vst [vmem:[%s812] sm:$0xff] %v804
  %814 = vst [vmem:[%s812 + $0x8] sm:$0xff] %v805
  %815 = vst [vmem:[%s812 + $0x10] sm:$0xff] %v806
  %816 = vst [vmem:[%s812 + $0x18] sm:$0xff] %v807
  %817 = vst [vmem:[%s812 + $0x20] sm:$0xff] %v808
  %818 = vst [vmem:[%s812 + $0x28] sm:$0xff] %v809
  %819 = vst [vmem:[%s812 + $0x30] sm:$0xff] %v810
  %820 = vst [vmem:[%s812 + $0x38] sm:$0xff] %v811
  // Predicated region
  $region30: #{aff_pallas.1} parent=0 // pred_check
    _
  $region31: #{aff_pallas.1} parent=0 // pred_check_branch
    %822 = sbr.rel (0) target = $region33
  $region32: #{aff_pallas.1} parent=0 // pred_region
    _
  $region33: #{aff_pallas.1} parent=0 // pred_fallthru
    _
  // Predicated region
  $region34: #{aff_pallas.1} parent=0 // pred_check
    _
  $region35: #{aff_pallas.1} parent=0 // pred_check_branch
    %824 = sbr.rel (0) target = $region37
  $region36: #{aff_pallas.1} parent=0 // pred_region
    _
  $region37: #{aff_pallas.1} parent=0 // pred_fallthru
    _

</llo_original>
